<compile_context>
chip_gen: v5e
topology: v5e:2x2
jax: 0.10.0
libtpu: 0.0.40
codegen_flags: <defaults>
</compile_context>

<pallas_src>
import jax
import jax.numpy as jnp
from jax.experimental import pallas as pl
from jax.experimental.pallas import tpu as pltpu


def _round_up(n: int, m: int) -> int:
    return ((n + m - 1) // m) * m


def _sublane_multiple(dtype) -> int:
    # Native tile is (8, 128) for 32-bit; sub-32-bit dtypes pack along sublanes.
    return max(8, 32 // max(jnp.dtype(dtype).itemsize, 1))


def _vmem_budgets() -> tuple[int, int]:
    """(vmem_limit_bytes, streamed-tile budget), generation aware.

    v5e/v6e have 128 MiB physical VMEM, v7x only 64 MiB; if the query fails we
    fall back to the v7x number so the sizing is safe on every generation.
    """
    phys = 64 * 1024 * 1024
    try:
        info = pltpu.get_tpu_info()
        cap = getattr(info, "vmem_capacity_bytes", None)
        if cap:
            phys = int(cap)
    except Exception:
        pass
    vmem_limit = min((phys * 3) // 4, 96 * 1024 * 1024)  # 48 MiB v7x, 96 MiB v5e/v6e
    tile_budget = vmem_limit // 2                         # headroom for temporaries
    return vmem_limit, tile_budget


def _narrow_f_kernel(x_ref, w_ref, b_ref, o_ref):
    # Lane-major GEMV for small feature counts.
    #   x_ref: (F, TB) VMEM tile -- batch on the lane axis (lane-dense)
    #   w_ref: (1, F)  SMEM      -- weight scalars
    #   b_ref: (1, 1)  SMEM      -- bias scalar
    #   o_ref: (1, TB) VMEM      -- lane-dense output row for this batch tile
    f_dim, tb = x_ref.shape
    x = x_ref[...]
    acc = jnp.zeros((1, tb), dtype=jnp.float32) + b_ref[0, 0]
    # Static unroll: F scalar*vector multiply-adds on full 128-lane vregs.
    # No cross-lane reduce, no transpose; each row promotes to the f32
    # accumulator individually (no blanket whole-tile upcast).
    for f in range(f_dim):
        acc = acc + x[f:f + 1, :] * w_ref[0, f]
    o_ref[...] = acc.astype(o_ref.dtype)


def _wide_f_kernel(x_ref, w_ref, b_ref, o_ref):
    # Row-major GEMV for wide feature counts (F >= 128): VPU multiply +
    # 128-lane XLU reduction.  Multiply in the input dtype, accumulate in f32.
    #   x_ref: (TB, F) VMEM tile
    #   w_ref: (1, F)  VMEM, resident across the grid (constant index_map)
    #   b_ref: (1, 1)  SMEM
    #   o_ref: (TB, 1) VMEM (output bytes are only B*4 -- column store is fine)
    xw = (x_ref[...] * w_ref[...].astype(x_ref.dtype)).astype(jnp.float32)
    y = jnp.sum(xw, axis=-1, keepdims=True) + b_ref[0, 0]
    o_ref[...] = y.astype(o_ref.dtype)


def linear_net_forward(x, weight, bias, *, block_rows=None):
    """Pallas forward pass of LinearNet (nn.Linear(n_feature, 1)).

    x: (B, F), weight: (1, F), bias: (1,)  ->  (B, 1).
    block_rows: optional batch-tile override (testing / tuning); None = auto.
    """
    B, F = x.shape
    assert weight.shape == (1, F) and bias.shape == (1,)
    out_dtype = x.dtype
    itemsize = x.dtype.itemsize
    sub = _sublane_multiple(x.dtype)
    vmem_limit, tile_budget = _vmem_budgets()
    params = pltpu.CompilerParams(
        dimension_semantics=("parallel",),     # shard batch tiles across v7x's 2 TCs
        vmem_limit_bytes=vmem_limit,
    )
    b_smem = bias.reshape(1, 1).astype(jnp.float32)

    if F < 128:
        # ---- lane-major path: batch on the lane axis -----------------------
        # One relayout of the tiny (B, F) input buys lane-dense vregs in the
        # kernel (vs. F/128 lane utilization otherwise).
        x_t = x.T                                        # (F, B)
        w_smem = weight.reshape(1, F).astype(jnp.float32)

        def footprint(tb):                               # double-buffered VMEM bytes
            lanes = _round_up(tb, 128)
            return 2 * (_round_up(F, sub) + sub) * lanes * itemsize

        if block_rows is None and footprint(B) <= tile_budget:
            tb, g = B, 1                                 # single block == whole array
        else:
            if block_rows is not None:
                tb = _round_up(block_rows, 128)
            else:
                # ~2 MiB of HBM x-traffic per grid step amortizes the per-step
                # overhead; cap by the lane/sublane-padded VMEM budget.
                target = _round_up(max((2 << 20) // max(F * itemsize, 1), 128), 128)
                per_lane = 2 * (_round_up(F, sub) + sub) * itemsize
                max_tb = max((tile_budget // per_lane) // 128 * 128, 128)
                tb = min(target, max_tb)
            tb = max(min(tb, _round_up(B, 128)), 128)
            g = pl.cdiv(B, tb)
        # (A tiled grid with g >= 2 keeps both v7x TensorCores busy via the
        #  "parallel" batch axis.)

        out = pl.pallas_call(
            _narrow_f_kernel,
            out_shape=jax.ShapeDtypeStruct((1, g * tb), out_dtype),
            grid_spec=pltpu.PrefetchScalarGridSpec(
                num_scalar_prefetch=0,
                grid=(g,),
                in_specs=[
                    pl.BlockSpec((F, tb), lambda i: (0, i)),  # x: lane-major, pipelined, ragged last block
                    pl.BlockSpec(memory_space=pltpu.SMEM),    # weight: scalar path
                    pl.BlockSpec(memory_space=pltpu.SMEM),    # bias: scalar path
                ],
                out_specs=pl.BlockSpec((1, tb), lambda i: (0, i)),
            ),
            compiler_params=params,
        )(x_t, w_smem, b_smem)
        # Free layout plumbing: lane-dense (1, g*tb) row -> (B, 1) column.
        return out.reshape(g * tb, 1)[:B]

    # ---- row-major path for wide features (F >= 128) -----------------------
    f_pad = _round_up(F, 128)
    w_bytes = 2 * 8 * f_pad * itemsize                   # resident weight buffers
    budget = max(tile_budget - w_bytes, 2 * sub * (f_pad + 128) * itemsize)

    def footprint(tb):                                    # x tile + (TB,1) out, double-buffered
        return 2 * _round_up(tb, sub) * (f_pad + 128) * itemsize

    if block_rows is None and footprint(B) <= budget:
        tb, g = _round_up(B, sub), 1
    else:
        if block_rows is not None:
            tb = _round_up(block_rows, sub)
        else:
            target = _round_up(max((2 << 20) // max(F * itemsize, 1), sub), sub)
            per_row = 2 * (f_pad + 128) * itemsize
            max_tb = max((budget // per_row) // sub * sub, sub)
            tb = min(target, max_tb)
        tb = max(min(tb, _round_up(B, sub)), sub)
        g = pl.cdiv(B, tb)
    # TODO(synk): for F so large that even an (8, F) double-buffered tile
    # exceeds VMEM, add a K (feature) grid axis with an f32 VMEM accumulator.

    out = pl.pallas_call(
        _wide_f_kernel,
        out_shape=jax.ShapeDtypeStruct((g * tb, 1), out_dtype),
        grid_spec=pltpu.PrefetchScalarGridSpec(
            num_scalar_prefetch=0,
            grid=(g,),
            in_specs=[
                pl.BlockSpec((tb, F), lambda i: (i, 0)),   # x: batch-tiled, pipelined, ragged last block
                pl.BlockSpec((1, F), lambda i: (0, 0)),    # weight: VMEM-resident
                pl.BlockSpec(memory_space=pltpu.SMEM),     # bias: scalar path
            ],
            out_specs=pl.BlockSpec((tb, 1), lambda i: (i, 0)),
        ),
        compiler_params=params,
    )(x, weight, b_smem)
    return out[:B]


if __name__ == "__main__":
    key = jax.random.PRNGKey(0)
    kx, kw, kx2, kx3 = jax.random.split(key, 4)

    # D2L example: 2 input features, 1 output.
    batch, n_feature = 8, 2
    x = jax.random.normal(kx, (batch, n_feature), dtype=jnp.float32)
    # Deterministic parameter init (mirrors init.normal_(weight, std=0.01), bias=0).
    weight = jax.random.normal(kw, (1, n_feature), dtype=jnp.float32) * 0.01
    bias = jnp.zeros((1,), dtype=jnp.float32)

    y = jax.block_until_ready(linear_net_forward(x, weight, bias))
    y_ref = x @ weight.T + bias
    assert y.shape == (batch, 1)
    assert jnp.allclose(y, y_ref, atol=1e-6, rtol=1e-6)

    # Ragged batch, auto tile selection (single-block fast path, no padding).
    x2 = jax.random.normal(kx2, (1000, n_feature), dtype=jnp.float32)
    y2 = jax.block_until_ready(linear_net_forward(x2, weight, bias))
    assert y2.shape == (1000, 1)
    assert jnp.allclose(y2, x2 @ weight.T + bias, atol=1e-5, rtol=1e-5)

    # Forced tiling: grid > 1 with a ragged final block (no jnp.pad anywhere).
    y3 = jax.block_until_ready(linear_net_forward(x2, weight, bias, block_rows=256))
    assert y3.shape == (1000, 1)
    assert jnp.allclose(y3, x2 @ weight.T + bias, atol=1e-5, rtol=1e-5)

    # Wide-feature path (F >= 128): row-major tiles + lane reduction.
    n_feature_w = 256
    xw = jax.random.normal(kx3, (300, n_feature_w), dtype=jnp.float32)
    ww = jax.random.normal(kw, (1, n_feature_w), dtype=jnp.float32) * 0.01
    yw = jax.block_until_ready(linear_net_forward(xw, ww, bias))
    yw_ref = jnp.einsum("bf,of->bo", xw, ww,
                        precision=jax.lax.Precision.HIGHEST) + bias
    assert yw.shape == (300, 1)
    assert jnp.allclose(yw, yw_ref, atol=2e-5, rtol=2e-5)

    print("KERNEL_OK")
</pallas_src>

<mosaic_0001>
module attributes {stable_mosaic.version = 11 : i64} {
  func.func @_narrow_f_kernel(%arg0: i32, %arg1: memref<2x8xf32, #tpu.memory_space<vmem>>, %arg2: memref<1x2xf32, #tpu.memory_space<smem>>, %arg3: memref<1x1xf32, #tpu.memory_space<smem>>, %arg4: memref<1x8xf32, #tpu.memory_space<vmem>>) attributes {dimension_semantics = [#tpu.dimension_semantics<parallel>], iteration_bounds = array<i64: 1>, scalar_prefetch = 0 : i64, scratch_operands = 0 : i64, tpu.core_type = #tpu.core_type<tc>, window_params = [{transform_indices = @transform_0, window_bounds = array<i64: 2, 8>}, {transform_indices = @transform_1, window_bounds = array<i64: 1, 2>}, {transform_indices = @transform_2, window_bounds = array<i64: 1, 1>}, {transform_indices = @transform_3, window_bounds = array<i64: 1, 8>}]} {
    %c0 = arith.constant 0 : index
    %c0_0 = arith.constant 0 : index
    %0 = vector.load %arg1[%c0, %c0_0] : memref<2x8xf32, #tpu.memory_space<vmem>>, vector<2x8xf32>
    %cst = arith.constant 0.000000e+00 : f32
    %1 = vector.broadcast %cst : f32 to vector<1x8xf32>
    %c0_1 = arith.constant 0 : index
    %c0_2 = arith.constant 0 : index
    %2 = memref.load %arg3[%c0_1, %c0_2] : memref<1x1xf32, #tpu.memory_space<smem>>
    %3 = vector.broadcast %2 : f32 to vector<1x8xf32>
    %4 = arith.addf %1, %3 : vector<1x8xf32>
    %5 = vector.extract_strided_slice %0 {offsets = [0, 0], sizes = [1, 8], strides = [1, 1]} : vector<2x8xf32> to vector<1x8xf32>
    %c0_3 = arith.constant 0 : index
    %c0_4 = arith.constant 0 : index
    %6 = memref.load %arg2[%c0_3, %c0_4] : memref<1x2xf32, #tpu.memory_space<smem>>
    %7 = vector.broadcast %6 : f32 to vector<1x8xf32>
    %8 = arith.mulf %5, %7 : vector<1x8xf32>
    %9 = arith.addf %4, %8 : vector<1x8xf32>
    %10 = vector.extract_strided_slice %0 {offsets = [1, 0], sizes = [1, 8], strides = [1, 1]} : vector<2x8xf32> to vector<1x8xf32>
    %c0_5 = arith.constant 0 : index
    %c1 = arith.constant 1 : index
    %11 = memref.load %arg2[%c0_5, %c1] : memref<1x2xf32, #tpu.memory_space<smem>>
    %12 = vector.broadcast %11 : f32 to vector<1x8xf32>
    %13 = arith.mulf %10, %12 : vector<1x8xf32>
    %14 = arith.addf %9, %13 : vector<1x8xf32>
    %c0_6 = arith.constant 0 : index
    %c0_7 = arith.constant 0 : index
    %15 = vector.load %arg4[%c0_6, %c0_7] : memref<1x8xf32, #tpu.memory_space<vmem>>, vector<1x8xf32>
    tpu.vector_store %arg4[%c0_6, %c0_7], %14 {strides = array<i32>} : memref<1x8xf32, #tpu.memory_space<vmem>>, vector<1x8xf32>,
    return
  }
  func.func @transform_0(%arg0: i32) -> (i32, i32) {
    %c0_i32 = arith.constant 0 : i32
    %c0_i32_0 = arith.constant 0 : i32
    return %c0_i32, %arg0 : i32, i32
  }
  func.func @transform_1(%arg0: i32) -> (i32, i32) {
    %c0_i32 = arith.constant 0 : i32
    %c0_i32_0 = arith.constant 0 : i32
    %c0_i32_1 = arith.constant 0 : i32
    return %c0_i32, %c0_i32_0 : i32, i32
  }
  func.func @transform_2(%arg0: i32) -> (i32, i32) {
    %c0_i32 = arith.constant 0 : i32
    %c0_i32_0 = arith.constant 0 : i32
    %c0_i32_1 = arith.constant 0 : i32
    return %c0_i32, %c0_i32_0 : i32, i32
  }
  func.func @transform_3(%arg0: i32) -> (i32, i32) {
    %c0_i32 = arith.constant 0 : i32
    %c0_i32_0 = arith.constant 0 : i32
    return %c0_i32, %arg0 : i32, i32
  }
}

</mosaic_0001>

<llo_original>
// kernel: tpu_custom_call.1
$region0: #{tpu_custom_call.1}
  #allocation0 [shape = 'u32[]', space=smem, size = 0x4, offset = 0x4, fixed_abs, tag = 'smem constant byte address 0x4 - core index']
  #allocation1 [shape = 'u32[72,128]{1,0:T(1,128)}', space=vmem, size = 0x9000, scoped, tag = 'internal scratch']
  #allocation2 [shape = 'f32[1,1]{1,0:T(1,128)S(6)}', space=smem, size = 0x200, scoped, tag = 'scoped memory for tpu_custom_call.1']
  %s0 = inlined_call_operand.vmem [shape: f32[2,8], index: 0, kind: input, shape index: {}]
  %s1 = inlined_call_operand.hbm [shape: f32[1,2], index: 1, kind: input, shape index: {}]
  %s2 = inlined_call_operand.<no memory space> [shape: f32[1,1], index: 2, kind: input, shape index: {}]
  %s3 = inlined_call_operand.hbm [shape: f32[1,8], index: 3, kind: output, shape index: {}]
  %s4 = sld [smem:[#allocation0]]
  $region26: #{tpu_custom_call.1} parent=0
    _
  %s6 = ssub.s32 1, %s4
  %s7 = scalar_select 0, %s6, %s4
  %8 = sst [smem:[#allocation2]] %s2
  $region1: #{tpu_custom_call.1} parent=0
    #allocation3 [shape = 'u8[512]{0}', space=smem, size = 0x200, scoped, tag = 'input window, operand 1, single buffered']
    #allocation4 [shape = 's32[1]{0}', space=sflag, size = 0x4, scoped, tag = 'scoped memory for tpu_custom_call.1']
    #allocation5 [shape = 's32[1]{0}', space=sflag, size = 0x4, scoped, tag = 'scoped memory for tpu_custom_call.1']
    #allocation6 [shape = 'u8[512]{0}', space=vmem, size = 0x400, scoped, tag = 'output window, operand 0, single buffered']
    %9 = vsyncpa [#allocation5], 0
    %10 = vsyncpa [#allocation4], 0
    // Predicated region
    $region2: #{tpu_custom_call.1} parent=1 // pred_check
      _
    $region3: #{tpu_custom_call.1} parent=1 // pred_check_branch
      %12 = sbr.rel (0) target = $region5
    $region4: #{tpu_custom_call.1} parent=1 // pred_region
      _
    $region5: #{tpu_custom_call.1} parent=1 // pred_fallthru
      _
    // Predicated region
    $region6: #{tpu_custom_call.1} parent=1 // pred_check
      _
    $region7: #{tpu_custom_call.1} parent=1 // pred_check_branch
      %14 = sbr.rel (0) target = $region9
    $region8: #{tpu_custom_call.1} parent=1 // pred_region
      %16 = vsyncadd [#allocation5], 0
      %s18 = sshll.u32 %s1, 4
      %s19 = int_to_ptr.hbm [resolvable:$true] %s18
      %21 = dma.hbm_to_smem %s19, 16, [#allocation3], [#allocation5]
    $region9: #{tpu_custom_call.1} parent=1 // pred_fallthru
      _
    // Predicated region
    $region10: #{tpu_custom_call.1} parent=1 // pred_check
      _
    $region11: #{tpu_custom_call.1} parent=1 // pred_check_branch
      %23 = sbr.rel (0) target = $region13
    $region12: #{tpu_custom_call.1} parent=1 // pred_region
      _
    $region13: #{tpu_custom_call.1} parent=1 // pred_fallthru
      _
    // Predicated region
    $region14: #{tpu_custom_call.1} parent=1 // pred_check
      _
    $region15: #{tpu_custom_call.1} parent=1 // pred_check_branch
      %25 = sbr.rel (0) target = $region17
    $region16: #{tpu_custom_call.1} parent=1 // pred_region
      %27 = dma.done [#allocation5], 16
    $region17: #{tpu_custom_call.1} parent=1 // pred_fallthru
      _
    %28 = sfence
    %v29 = vld [vmem:[%s0] sm:$0x3]
    %s30 = sld [smem:[#allocation2]]
    %v31 = vstv %s30
    %v32 = vadd.f32 %v31, 0.0
    %s33 = sld [smem:[#allocation3]]
    %v34 = vstv %s33
    %v35 = vmul.f32 %v29, %v34
    %v36 = vadd.f32 %v32, %v35
    %s37 = sld [smem:[#allocation3 + $0x1]]
    %v38 = vstv %s37
    %v39 = vmul.f32 %v29, %v38
    %v41 = vrot.slane %v39, 1
    %v43 = vadd.f32 %v36, %v41
    %vm44 = vcmask 57344
    %45 = vst.msk [vmem:[#allocation6] sm:$0x1] %vm44, %v43
    // Predicated region
    $region18: #{tpu_custom_call.1} parent=1 // pred_check
      _
    $region19: #{tpu_custom_call.1} parent=1 // pred_check_branch
      %47 = sbr.rel (0) target = $region21
    $region20: #{tpu_custom_call.1} parent=1 // pred_region
      %49 = vsyncadd [#allocation4], 0
      %s51 = sshll.u32 [#allocation6], 4
      %s52 = int_to_ptr.vmem [resolvable:$true] %s51
      %s53 = sshll.u32 %s3, 4
      %s54 = int_to_ptr.hbm [resolvable:$true] %s53
      %56 = dma.vmem_to_hbm [thread:$0]  %s52, 16, %s54, [#allocation4]
    $region21: #{tpu_custom_call.1} parent=1 // pred_fallthru
      _
    // Predicated region
    $region22: #{tpu_custom_call.1} parent=1 // pred_check
      _
    $region23: #{tpu_custom_call.1} parent=1 // pred_check_branch
      %58 = sbr.rel (0) target = $region25
    $region24: #{tpu_custom_call.1} parent=1 // pred_region
      %60 = dma.done [#allocation4], 16
    $region25: #{tpu_custom_call.1} parent=1 // pred_fallthru
      _
    %61 = vsyncpa [#allocation4], 1
    %62 = vsyncpa [#allocation5], 1

</llo_original>
